<compile_context>
chip_gen: v5e
topology: v5e:2x2
jax: 0.10.0
libtpu: 0.0.40
codegen_flags: <defaults>
</compile_context>

<pallas_src>
import jax
import jax.numpy as jnp
from jax.experimental import pallas as pl
from jax.experimental.pallas import tpu as pltpu

_LANE = 128
_SUBLANE = 8


def _round_up(x, m):
    return ((x + m - 1) // m) * m


def _make_l2_kernel(d_total, td):
    """Streaming per-row sum-of-squares kernel for a (B, d_total) array tiled
    (TB, td).  Grid = (row blocks, D blocks) with the reduction (D) axis last.
    A (TB, 128) f32 VMEM scratch holds per-lane partial sums; the cross-lane
    (XLU) reduce + sqrt happen once, at the final D step."""
    n_chunks = td // _LANE
    ragged = (d_total % td) != 0        # last D block is partial -> mask it

    def kernel(x_ref, out_ref, acc_ref):
        k = pl.program_id(1)
        last = pl.num_programs(1) - 1

        @pl.when(k == 0)
        def _init():
            acc_ref[...] = jnp.zeros_like(acc_ref)

        tb = acc_ref.shape[0]

        def accumulate(valid_cols):
            # Slice the Ref per 128-lane chunk (keeps vreg pressure low) and
            # do a single accumulator RMW per grid step (one batched store).
            acc = acc_ref[...]
            lane = None
            if valid_cols is not None:
                lane = jax.lax.broadcasted_iota(jnp.int32, (tb, _LANE), 1)
            for i in range(n_chunks):
                c = x_ref[:, i * _LANE:(i + 1) * _LANE].astype(jnp.float32)
                if valid_cols is not None:
                    # Mask BEFORE squaring so unspecified data in the padded
                    # tail of a partial edge block cannot propagate NaN/Inf.
                    c = jnp.where(lane + (i * _LANE) < valid_cols, c, 0.0)
                acc = acc + c * c
            acc_ref[...] = acc

        if not ragged:
            accumulate(None)
        else:
            @pl.when(k != last)
            def _steady():
                accumulate(None)

            @pl.when(k == last)
            def _edge():
                accumulate(d_total - k * td)   # valid columns in this block

        @pl.when(k == last)
        def _finalize():
            out_ref[...] = jnp.sqrt(jnp.sum(acc_ref[...], axis=1, keepdims=True))

    return kernel


def _compute_row_norms(pert_flat, *, max_td=8192, max_tb=128):
    """Per-row L2 norms of a (B, D) float array via a tiled Pallas reduction.

    No host/XLA-side padding: ragged edges are handled in-kernel."""
    B, D = pert_flat.shape
    itemsize = jnp.dtype(pert_flat.dtype).itemsize

    # --- tile geometry ------------------------------------------------------
    TD = min(_round_up(max(D, _LANE), _LANE), max_td)      # lane (fast) axis
    TB = min(_round_up(B, _SUBLANE), max_tb)               # sublane (row) axis
    # v7x megacore: ensure >=2 row blocks when B is large enough that halving
    # the row tile still leaves a multi-MiB DMA per grid step.
    if B >= 128 and pl.cdiv(B, TB) < 2:
        TB = _round_up(-(-B // 2), _SUBLANE)

    grid = (pl.cdiv(B, TB), pl.cdiv(D, TD))                # reduction axis last

    out = pl.pallas_call(
        _make_l2_kernel(D, TD),
        out_shape=jax.ShapeDtypeStruct((B, 1), jnp.float32),
        grid_spec=pltpu.PrefetchScalarGridSpec(
            num_scalar_prefetch=0,
            grid=grid,
            in_specs=[pl.BlockSpec((TB, TD), lambda i, k: (i, k))],
            out_specs=pl.BlockSpec((TB, 1), lambda i, k: (i, 0)),
            scratch_shapes=[pltpu.VMEM((TB, _LANE), jnp.float32)],
        ),
        compiler_params=pltpu.CompilerParams(
            # Row blocks are independent (megacore-shardable on v7x); the D
            # reduction axis must stay sequential.
            dimension_semantics=("parallel", "arbitrary"),
            # Double-buffered input tile <= 2 * 128 * 8192 * 4B = 8 MiB plus a
            # 64 KiB accumulator — fits v5e/v6e/v7x scoped VMEM comfortably.
            vmem_limit_bytes=32 * 1024 * 1024,
        ),
        cost_estimate=pl.CostEstimate(
            flops=2 * B * D,
            transcendentals=0,
            bytes_accessed=B * D * itemsize + B * 4,
        ),
    )(pert_flat)
    return out[:, 0]


def _compute_correct_mask(y_pred, y_attack):
    """correct[b] = (top-k indices of y_pred[b], descending) == y_attack[b]."""
    # (B, NUM_CLASSES) logits are tiny; a dedicated pallas_call would be pure
    # launch/DMA overhead, so use lax.top_k (O(C), jit-friendly).
    # Note: tie order may differ from torch when logits are exactly tied.
    k = y_attack.shape[-1]
    _, top_idx = jax.lax.top_k(y_pred, k)
    return jnp.all(top_idx == y_attack.astype(top_idx.dtype), axis=-1)


@jax.jit
def _energy_norms_and_mask(y_pred, y_attack, perturbations):
    """jit-friendly core: per-row L2 norms (Pallas) + attack-success mask."""
    B = y_pred.shape[0]
    correct = _compute_correct_mask(y_pred, y_attack)       # (B,) bool
    pert_flat = perturbations.reshape(B, -1)                 # flatten(1)
    # TODO(synk): stream only the "correct" rows via scalar-prefetch row gather;
    # BlockSpec DMA is block-granular, so gathering scattered single rows would
    # force 1-sublane tiles — skipped, all rows are reduced and masked after.
    norms = _compute_row_norms(pert_flat)                    # (B,) f32
    return norms, correct


def energy_forward(y_pred, y_attack, perturbations, p="2"):
    """Pallas implementation of Energy.forward (p='2', the module default).

    `norms[correct]` is a dynamic-shape boolean selection on the tiny per-row
    norm vector; it runs eagerly outside jit while the heavy path is jitted.
    """
    assert p == "2"  # TODO(synk): other vector-norm orders not implemented.
    norms, correct = _energy_norms_and_mask(y_pred, y_attack, perturbations)
    return norms[correct]


if __name__ == "__main__":
    key = jax.random.PRNGKey(0)
    k1, k2, k3 = jax.random.split(key, 3)

    # Shapes implied by the module: NCHW perturbations, (B, C) logits, (B, K) targets.
    B, C, H, W = 2, 4, 16, 16
    NUM_CLASSES, K = 10, 3

    y_pred = jax.random.normal(k1, (B, NUM_CLASSES), dtype=jnp.float32)
    perturbations = 0.1 * jax.random.normal(k2, (B, C, H, W), dtype=jnp.float32)

    # Row 0: successful attack (true top-K, in order); row 1: guaranteed wrong.
    top = jnp.argsort(-y_pred, axis=-1)[:, :K].astype(jnp.int32)
    bot = jnp.argsort(y_pred, axis=-1)[:, :K].astype(jnp.int32)
    y_attack = top.at[1].set(bot[1])

    out = energy_forward(y_pred, y_attack, perturbations)
    out = jax.block_until_ready(out)

    # Reference check in plain JAX.
    ref_correct = jnp.all(jnp.argsort(-y_pred, axis=-1)[:, :K] == y_attack, axis=-1)
    ref_norms = jnp.linalg.norm(perturbations.reshape(B, -1), axis=-1)[ref_correct]
    assert out.shape == ref_norms.shape
    assert jnp.allclose(out, ref_norms, rtol=1e-5, atol=1e-6)

    # Extra check: ragged B and D edges (exercises the in-kernel mask path,
    # which replaced the old full-tensor jnp.pad).
    x_ragged = jax.random.normal(k3, (5, 330), dtype=jnp.float32)
    norms_ragged = jax.block_until_ready(jax.jit(_compute_row_norms)(x_ragged))
    ref_ragged = jnp.linalg.norm(x_ragged, axis=-1)
    assert jnp.allclose(norms_ragged, ref_ragged, rtol=1e-5, atol=1e-6)

    print("KERNEL_OK")
</pallas_src>

<mosaic_0001>
module attributes {stable_mosaic.version = 11 : i64} {
  func.func @kernel(%arg0: i32, %arg1: i32, %arg2: memref<8x1024xf32, #tpu.memory_space<vmem>>, %arg3: memref<8x1xf32, #tpu.memory_space<vmem>>, %arg4: memref<8x128xf32, #tpu.memory_space<vmem>>) attributes {dimension_semantics = [#tpu.dimension_semantics<parallel>, #tpu.dimension_semantics<arbitrary>], iteration_bounds = array<i64: 1, 1>, scalar_prefetch = 0 : i64, scratch_operands = 1 : i64, tpu.core_type = #tpu.core_type<tc>, window_params = [{transform_indices = @transform_0, window_bounds = array<i64: 8, 1024>}, {transform_indices = @transform_1, window_bounds = array<i64: 8, 1>}]} {
    %c0_i32 = arith.constant 0 : i32
    %0 = arith.cmpi eq, %arg1, %c0_i32 : i32
    %1 = arith.extui %0 : i1 to i32
    %c0_i32_0 = arith.constant 0 : i32
    %2 = arith.cmpi ne, %1, %c0_i32_0 : i32
    scf.if %2 {
      %cst = arith.constant 0.000000e+00 : f32
      %32 = vector.broadcast %cst : f32 to vector<8x128xf32>
      %c0_15 = arith.constant 0 : index
      %c0_16 = arith.constant 0 : index
      %33 = vector.load %arg4[%c0_15, %c0_16] : memref<8x128xf32, #tpu.memory_space<vmem>>, vector<8x128xf32>
      tpu.vector_store %arg4[%c0_15, %c0_16], %32 {strides = array<i32>} : memref<8x128xf32, #tpu.memory_space<vmem>>, vector<8x128xf32>,
    } else {
    }
    %c0 = arith.constant 0 : index
    %c0_1 = arith.constant 0 : index
    %3 = vector.load %arg4[%c0, %c0_1] : memref<8x128xf32, #tpu.memory_space<vmem>>, vector<8x128xf32>
    %c0_2 = arith.constant 0 : index
    %c0_3 = arith.constant 0 : index
    %4 = vector.load %arg2[%c0_2, %c0_3] : memref<8x1024xf32, #tpu.memory_space<vmem>>, vector<8x128xf32>
    %5 = arith.mulf %4, %4 : vector<8x128xf32>
    %6 = arith.addf %3, %5 : vector<8x128xf32>
    %c0_4 = arith.constant 0 : index
    %c128 = arith.constant 128 : index
    %7 = vector.load %arg2[%c0_4, %c128] : memref<8x1024xf32, #tpu.memory_space<vmem>>, vector<8x128xf32>
    %8 = arith.mulf %7, %7 : vector<8x128xf32>
    %9 = arith.addf %6, %8 : vector<8x128xf32>
    %c0_5 = arith.constant 0 : index
    %c256 = arith.constant 256 : index
    %10 = vector.load %arg2[%c0_5, %c256] : memref<8x1024xf32, #tpu.memory_space<vmem>>, vector<8x128xf32>
    %11 = arith.mulf %10, %10 : vector<8x128xf32>
    %12 = arith.addf %9, %11 : vector<8x128xf32>
    %c0_6 = arith.constant 0 : index
    %c384 = arith.constant 384 : index
    %13 = vector.load %arg2[%c0_6, %c384] : memref<8x1024xf32, #tpu.memory_space<vmem>>, vector<8x128xf32>
    %14 = arith.mulf %13, %13 : vector<8x128xf32>
    %15 = arith.addf %12, %14 : vector<8x128xf32>
    %c0_7 = arith.constant 0 : index
    %c512 = arith.constant 512 : index
    %16 = vector.load %arg2[%c0_7, %c512] : memref<8x1024xf32, #tpu.memory_space<vmem>>, vector<8x128xf32>
    %17 = arith.mulf %16, %16 : vector<8x128xf32>
    %18 = arith.addf %15, %17 : vector<8x128xf32>
    %c0_8 = arith.constant 0 : index
    %c640 = arith.constant 640 : index
    %19 = vector.load %arg2[%c0_8, %c640] : memref<8x1024xf32, #tpu.memory_space<vmem>>, vector<8x128xf32>
    %20 = arith.mulf %19, %19 : vector<8x128xf32>
    %21 = arith.addf %18, %20 : vector<8x128xf32>
    %c0_9 = arith.constant 0 : index
    %c768 = arith.constant 768 : index
    %22 = vector.load %arg2[%c0_9, %c768] : memref<8x1024xf32, #tpu.memory_space<vmem>>, vector<8x128xf32>
    %23 = arith.mulf %22, %22 : vector<8x128xf32>
    %24 = arith.addf %21, %23 : vector<8x128xf32>
    %c0_10 = arith.constant 0 : index
    %c896 = arith.constant 896 : index
    %25 = vector.load %arg2[%c0_10, %c896] : memref<8x1024xf32, #tpu.memory_space<vmem>>, vector<8x128xf32>
    %26 = arith.mulf %25, %25 : vector<8x128xf32>
    %27 = arith.addf %24, %26 : vector<8x128xf32>
    %c0_11 = arith.constant 0 : index
    %c0_12 = arith.constant 0 : index
    %28 = vector.load %arg4[%c0_11, %c0_12] : memref<8x128xf32, #tpu.memory_space<vmem>>, vector<8x128xf32>
    tpu.vector_store %arg4[%c0_11, %c0_12], %27 {strides = array<i32>} : memref<8x128xf32, #tpu.memory_space<vmem>>, vector<8x128xf32>,
    %c0_i32_13 = arith.constant 0 : i32
    %29 = arith.cmpi eq, %arg1, %c0_i32_13 : i32
    %30 = arith.extui %29 : i1 to i32
    %c0_i32_14 = arith.constant 0 : i32
    %31 = arith.cmpi ne, %30, %c0_i32_14 : i32
    scf.if %31 {
      %c0_15 = arith.constant 0 : index
      %c0_16 = arith.constant 0 : index
      %32 = vector.load %arg4[%c0_15, %c0_16] : memref<8x128xf32, #tpu.memory_space<vmem>>, vector<8x128xf32>
      %cst = arith.constant dense<0.000000e+00> : vector<8xf32>
      %33 = vector.multi_reduction <add>, %32, %cst [1] : vector<8x128xf32> to vector<8xf32>
      %34 = vector.shape_cast %33 : vector<8xf32> to vector<8x1xf32>
      %35 = math.sqrt %34 : vector<8x1xf32>
      %c0_17 = arith.constant 0 : index
      %c0_18 = arith.constant 0 : index
      %36 = vector.load %arg3[%c0_17, %c0_18] : memref<8x1xf32, #tpu.memory_space<vmem>>, vector<8x1xf32>
      tpu.vector_store %arg3[%c0_17, %c0_18], %35 {strides = array<i32>} : memref<8x1xf32, #tpu.memory_space<vmem>>, vector<8x1xf32>,
    } else {
    }
    return
  }
  func.func @transform_0(%arg0: i32, %arg1: i32) -> (i32, i32) {
    %c0_i32 = arith.constant 0 : i32
    return %arg0, %arg1 : i32, i32
  }
  func.func @transform_1(%arg0: i32, %arg1: i32) -> (i32, i32) {
    %c0_i32 = arith.constant 0 : i32
    %c0_i32_0 = arith.constant 0 : i32
    return %arg0, %c0_i32 : i32, i32
  }
}

</mosaic_0001>

<llo_original>
// kernel: _energy_norms_and_mask.1
$region0: #{_energy_norms_and_mask.1}
  #allocation0 [shape = 'u32[]', space=smem, size = 0x4, offset = 0x4, fixed_abs, tag = 'smem constant byte address 0x4 - core index']
  #allocation1 [shape = 'u32[72,128]{1,0:T(1,128)}', space=vmem, size = 0x9000, scoped, tag = 'internal scratch']
  #allocation2 [shape = 'f32[8,128]{1,0:T(8,128)}', space=vmem, size = 0x1000, scoped, tag = 'scratch operand']
  %s0 = inlined_call_operand.vmem [shape: f32[2,1024], index: 0, kind: input, shape index: {}]
  %s1 = inlined_call_operand.vmem [shape: f32[2,1], index: 1, kind: output, shape index: {}]
  %s2 = sld [smem:[#allocation0]]
  $region52: #{_energy_norms_and_mask.1} parent=0
    _
  %s4 = ssub.s32 1, %s2
  %s5 = scalar_select 0, %s4, %s2
  $region1: #{_energy_norms_and_mask.1} parent=0
    #allocation3 [shape = 'u8[4096]{0}', space=vmem, size = 0x1000, scoped, tag = 'output window, operand 0, single buffered']
    // Predicated region
    $region2: #{_energy_norms_and_mask.1} parent=1 // pred_check
      _
    $region3: #{_energy_norms_and_mask.1} parent=1 // pred_check_branch
      %7 = sbr.rel (0) target = $region5
    $region4: #{_energy_norms_and_mask.1} parent=1 // pred_region
      _
    $region5: #{_energy_norms_and_mask.1} parent=1 // pred_fallthru
      _
    %p8 = scmp.eq.s32.totalorder 0, 0
    // Predicated region
    $region6: #{_energy_norms_and_mask.1} parent=1 // pred_check
      %p9 = pneg %p8
    $region7: #{_energy_norms_and_mask.1} parent=1 // pred_check_branch
      %11 = sbr.rel (%p9) target = $region9
    $region8: #{_energy_norms_and_mask.1} parent=1 // pred_region
      %12 = vst [vmem:[#allocation2] sm:$0xff] 0.0
    $region9: #{_energy_norms_and_mask.1} parent=1 // pred_fallthru
      _
    %v13 = vld [vmem:[#allocation2] sm:$0xff]
    %v14 = vld [vmem:[%s0] sm:$0x3]
    %v15 = vld [vmem:[%s0 + $0x10] sm:$0x3]
    %v16 = vld [vmem:[%s0 + $0x20] sm:$0x3]
    %v17 = vld [vmem:[%s0 + $0x30] sm:$0x3]
    %v18 = vmul.f32 %v14, %v14
    %v19 = vmul.f32 %v15, %v15
    %v20 = vmul.f32 %v16, %v16
    %v21 = vmul.f32 %v17, %v17
    %26 = vst [vmem:[#allocation1] ss:$4 sm:$0xff] %v18
    %s27 = scalar_lea.vmem [#allocation1], 1
    %28 = vst [vmem:[%s27] ss:$4 sm:$0xff] %v19
    %s29 = scalar_lea.vmem [#allocation1], 2
    %30 = vst [vmem:[%s29] ss:$4 sm:$0xff] %v20
    %s31 = scalar_lea.vmem [#allocation1], 3
    %32 = vst [vmem:[%s31] ss:$4 sm:$0xff] %v21
    %v33 = vld.sshfl [vmem:[#allocation1] sm:$0xff pattern:$0x73625140]
    %v35 = vadd.f32 %v13, %v33
    %v36 = vld [vmem:[%s0 + $0x2] sm:$0x3]
    %v37 = vld [vmem:[%s0 + $0x12] sm:$0x3]
    %v38 = vld [vmem:[%s0 + $0x22] sm:$0x3]
    %v39 = vld [vmem:[%s0 + $0x32] sm:$0x3]
    %v40 = vmul.f32 %v36, %v36
    %v41 = vmul.f32 %v37, %v37
    %v42 = vmul.f32 %v38, %v38
    %v43 = vmul.f32 %v39, %v39
    %48 = vst [vmem:[#allocation1] ss:$4 sm:$0xff] %v40
    %s49 = scalar_lea.vmem [#allocation1], 1
    %50 = vst [vmem:[%s49] ss:$4 sm:$0xff] %v41
    %s51 = scalar_lea.vmem [#allocation1], 2
    %52 = vst [vmem:[%s51] ss:$4 sm:$0xff] %v42
    %s53 = scalar_lea.vmem [#allocation1], 3
    %54 = vst [vmem:[%s53] ss:$4 sm:$0xff] %v43
    %v55 = vld.sshfl [vmem:[#allocation1] sm:$0xff pattern:$0x73625140]
    %v57 = vadd.f32 %v35, %v55
    %v58 = vld [vmem:[%s0 + $0x4] sm:$0x3]
    %v59 = vld [vmem:[%s0 + $0x14] sm:$0x3]
    %v60 = vld [vmem:[%s0 + $0x24] sm:$0x3]
    %v61 = vld [vmem:[%s0 + $0x34] sm:$0x3]
    %v62 = vmul.f32 %v58, %v58
    %v63 = vmul.f32 %v59, %v59
    %v64 = vmul.f32 %v60, %v60
    %v65 = vmul.f32 %v61, %v61
    %70 = vst [vmem:[#allocation1] ss:$4 sm:$0xff] %v62
    %s71 = scalar_lea.vmem [#allocation1], 1
    %72 = vst [vmem:[%s71] ss:$4 sm:$0xff] %v63
    %s73 = scalar_lea.vmem [#allocation1], 2
    %74 = vst [vmem:[%s73] ss:$4 sm:$0xff] %v64
    %s75 = scalar_lea.vmem [#allocation1], 3
    %76 = vst [vmem:[%s75] ss:$4 sm:$0xff] %v65
    %v77 = vld.sshfl [vmem:[#allocation1] sm:$0xff pattern:$0x73625140]
    %v79 = vadd.f32 %v57, %v77
    %v80 = vld [vmem:[%s0 + $0x6] sm:$0x3]
    %v81 = vld [vmem:[%s0 + $0x16] sm:$0x3]
    %v82 = vld [vmem:[%s0 + $0x26] sm:$0x3]
    %v83 = vld [vmem:[%s0 + $0x36] sm:$0x3]
    %v84 = vmul.f32 %v80, %v80
    %v85 = vmul.f32 %v81, %v81
    %v86 = vmul.f32 %v82, %v82
    %v87 = vmul.f32 %v83, %v83
    %92 = vst [vmem:[#allocation1] ss:$4 sm:$0xff] %v84
    %s93 = scalar_lea.vmem [#allocation1], 1
    %94 = vst [vmem:[%s93] ss:$4 sm:$0xff] %v85
    %s95 = scalar_lea.vmem [#allocation1], 2
    %96 = vst [vmem:[%s95] ss:$4 sm:$0xff] %v86
    %s97 = scalar_lea.vmem [#allocation1], 3
    %98 = vst [vmem:[%s97] ss:$4 sm:$0xff] %v87
    %v99 = vld.sshfl [vmem:[#allocation1] sm:$0xff pattern:$0x73625140]
    %v101 = vadd.f32 %v79, %v99
    %v102 = vld [vmem:[%s0 + $0x8] sm:$0x3]
    %v103 = vld [vmem:[%s0 + $0x18] sm:$0x3]
    %v104 = vld [vmem:[%s0 + $0x28] sm:$0x3]
    %v105 = vld [vmem:[%s0 + $0x38] sm:$0x3]
    %v106 = vmul.f32 %v102, %v102
    %v107 = vmul.f32 %v103, %v103
    %v108 = vmul.f32 %v104, %v104
    %v109 = vmul.f32 %v105, %v105
    %114 = vst [vmem:[#allocation1] ss:$4 sm:$0xff] %v106
    %s115 = scalar_lea.vmem [#allocation1], 1
    %116 = vst [vmem:[%s115] ss:$4 sm:$0xff] %v107
    %s117 = scalar_lea.vmem [#allocation1], 2
    %118 = vst [vmem:[%s117] ss:$4 sm:$0xff] %v108
    %s119 = scalar_lea.vmem [#allocation1], 3
    %120 = vst [vmem:[%s119] ss:$4 sm:$0xff] %v109
    %v121 = vld.sshfl [vmem:[#allocation1] sm:$0xff pattern:$0x73625140]
    %v123 = vadd.f32 %v101, %v121
    %v124 = vld [vmem:[%s0 + $0xa] sm:$0x3]
    %v125 = vld [vmem:[%s0 + $0x1a] sm:$0x3]
    %v126 = vld [vmem:[%s0 + $0x2a] sm:$0x3]
    %v127 = vld [vmem:[%s0 + $0x3a] sm:$0x3]
    %v128 = vmul.f32 %v124, %v124
    %v129 = vmul.f32 %v125, %v125
    %v130 = vmul.f32 %v126, %v126
    %v131 = vmul.f32 %v127, %v127
    %136 = vst [vmem:[#allocation1] ss:$4 sm:$0xff] %v128
    %s137 = scalar_lea.vmem [#allocation1], 1
    %138 = vst [vmem:[%s137] ss:$4 sm:$0xff] %v129
    %s139 = scalar_lea.vmem [#allocation1], 2
    %140 = vst [vmem:[%s139] ss:$4 sm:$0xff] %v130
    %s141 = scalar_lea.vmem [#allocation1], 3
    %142 = vst [vmem:[%s141] ss:$4 sm:$0xff] %v131
    %v143 = vld.sshfl [vmem:[#allocation1] sm:$0xff pattern:$0x73625140]
    %v145 = vadd.f32 %v123, %v143
    %v146 = vld [vmem:[%s0 + $0xc] sm:$0x3]
    %v147 = vld [vmem:[%s0 + $0x1c] sm:$0x3]
    %v148 = vld [vmem:[%s0 + $0x2c] sm:$0x3]
    %v149 = vld [vmem:[%s0 + $0x3c] sm:$0x3]
    %v150 = vmul.f32 %v146, %v146
    %v151 = vmul.f32 %v147, %v147
    %v152 = vmul.f32 %v148, %v148
    %v153 = vmul.f32 %v149, %v149
    %158 = vst [vmem:[#allocation1] ss:$4 sm:$0xff] %v150
    %s159 = scalar_lea.vmem [#allocation1], 1
    %160 = vst [vmem:[%s159] ss:$4 sm:$0xff] %v151
    %s161 = scalar_lea.vmem [#allocation1], 2
    %162 = vst [vmem:[%s161] ss:$4 sm:$0xff] %v152
    %s163 = scalar_lea.vmem [#allocation1], 3
    %164 = vst [vmem:[%s163] ss:$4 sm:$0xff] %v153
    %v165 = vld.sshfl [vmem:[#allocation1] sm:$0xff pattern:$0x73625140]
    %v167 = vadd.f32 %v145, %v165
    %v168 = vld [vmem:[%s0 + $0xe] sm:$0x3]
    %v169 = vld [vmem:[%s0 + $0x1e] sm:$0x3]
    %v170 = vld [vmem:[%s0 + $0x2e] sm:$0x3]
    %v171 = vld [vmem:[%s0 + $0x3e] sm:$0x3]
    %v172 = vmul.f32 %v168, %v168
    %v173 = vmul.f32 %v169, %v169
    %v174 = vmul.f32 %v170, %v170
    %v175 = vmul.f32 %v171, %v171
    %180 = vst [vmem:[#allocation1] ss:$4 sm:$0xff] %v172
    %s181 = scalar_lea.vmem [#allocation1], 1
    %182 = vst [vmem:[%s181] ss:$4 sm:$0xff] %v173
    %s183 = scalar_lea.vmem [#allocation1], 2
    %184 = vst [vmem:[%s183] ss:$4 sm:$0xff] %v174
    %s185 = scalar_lea.vmem [#allocation1], 3
    %186 = vst [vmem:[%s185] ss:$4 sm:$0xff] %v175
    %v187 = vld.sshfl [vmem:[#allocation1] sm:$0xff pattern:$0x73625140]
    %v189 = vadd.f32 %v167, %v187
    %190 = vst [vmem:[#allocation2] sm:$0xff] %v189
    // Predicated region
    $region10: #{_energy_norms_and_mask.1} parent=1 // pred_check
      %p191 = pneg %p8
    $region11: #{_energy_norms_and_mask.1} parent=1 // pred_check_branch
      %193 = sbr.rel (%p191) target = $region13
    $region12: #{_energy_norms_and_mask.1} parent=1 // pred_region
      %v194 = vld [vmem:[#allocation2] sm:$0xff]
      %195 = vadd.xlane.f32.xlu0 %v194
      %v196 = vpop.xlane.xlu0 %195
      %v197 = vrsqrt.pop %v196
      %v198 = vmul.f32 %v197, %v196
      %v199 = vmul.f32 %v198, %v197
      %v200 = vmul.f32 0.5, %v199
      %v201 = vsub.f32 1.5, %v200
      %v202 = vmul.f32 %v197, %v201
      %v203 = vmul.f32 %v196, %v202
      %vm204 = vcmp.eq.f32.partialorder %v196, inf
      %v205 = vsel %vm204, %v196, %v203
      %vm206 = vcmp.eq.f32.partialorder %v196, 0.0
      %v207 = vand.u32 %v196, 2147483648
      %v208 = vsel %vm206, %v207, %v205
      %vm209 = vcmask 7168
      %210 = vst.msk [vmem:[#allocation3] sm:$0xff] %vm209, %v208
    $region13: #{_energy_norms_and_mask.1} parent=1 // pred_fallthru
      _
    // Predicated region
    $region14: #{_energy_norms_and_mask.1} parent=1 // pred_check
      _
    $region15: #{_energy_norms_and_mask.1} parent=1 // pred_check_branch
      %212 = sbr.rel (0) target = $region17
    $region16: #{_energy_norms_and_mask.1} parent=1 // pred_region
      // Predicated region
      $region18: #{_energy_norms_and_mask.1} parent=16 // pred_check
        _
      $region19: #{_energy_norms_and_mask.1} parent=16 // pred_check_branch
        %214 = sbr.rel (0) target = $region21
      $region20: #{_energy_norms_and_mask.1} parent=16 // pred_region
        // Predicated region
        $region22: #{_energy_norms_and_mask.1} parent=20 // pred_check
          _
        $region23: #{_energy_norms_and_mask.1} parent=20 // pred_check_branch
          %216 = sbr.rel target = $region25
        $region24: #{_energy_norms_and_mask.1} parent=20 // pred_region
          // Predicated region
          $region37: #{_energy_norms_and_mask.1} parent=24 // pred_check
            _
          $region38: #{_energy_norms_and_mask.1} parent=24 // pred_check_branch
            %232 = sbr.rel (0) target = $region40
          $region39: #{_energy_norms_and_mask.1} parent=24 // pred_region
            %s234 = ssub.s32 4, 1
            loop: start=0, step=1, limit=1
            $region41: #{_energy_norms_and_mask.1} parent=39 // loop_pre_header
              _
            $region42: #{_energy_norms_and_mask.1} parent=39 // loop_header
              %s236 = sphi 0, %s240
              %p237 = scmp.ge.s32.totalorder %s236, 1
              %s241 = sphi [#allocation3], [#allocation3]
              %s242 = sphi %s1, %s1
            $region43: #{_energy_norms_and_mask.1} parent=39 // loop_header_branch
              %239 = sbr.rel (%p237) target = $region47
            $region44: #{_energy_norms_and_mask.1} parent=39 // loop_body
              %v243 = vld [vmem:[%s241] sm:%s234]
              %244 = vst [vmem:[%s242] sm:%s234] %v243
            $region45: #{_energy_norms_and_mask.1} parent=39 // loop_footer
              %s240 = sadd.s32 1, %s236
            $region46: #{_energy_norms_and_mask.1} parent=39 // loop_footer_branch
              %235 = sbr.rel target = $region42
            $region47: #{_energy_norms_and_mask.1} parent=39 // loop_exit
              _
          $region40: #{_energy_norms_and_mask.1} parent=24 // pred_fallthru
            _
        $region25: #{_energy_norms_and_mask.1} parent=20 // pred_fallthru
          _
        // Predicated region
        $region26: #{_energy_norms_and_mask.1} parent=20 // pred_check
          _
        $region27: #{_energy_norms_and_mask.1} parent=20 // pred_check_branch
          %218 = sbr.rel (0) target = $region29
        $region28: #{_energy_norms_and_mask.1} parent=20 // pred_region
          %s220 = ssub.s32 4, 1
          loop: start=0, step=1, limit=1
          $region30: #{_energy_norms_and_mask.1} parent=28 // loop_pre_header
            _
          $region31: #{_energy_norms_and_mask.1} parent=28 // loop_header
            %s222 = sphi 0, %s226
            %p223 = scmp.ge.s32.totalorder %s222, 1
            %s227 = sphi [#allocation3], [#allocation3]
            %s228 = sphi %s1, %s1
          $region32: #{_energy_norms_and_mask.1} parent=28 // loop_header_branch
            %225 = sbr.rel (%p223) target = $region36
          $region33: #{_energy_norms_and_mask.1} parent=28 // loop_body
            %v229 = vld [vmem:[%s227] sm:%s220]
            %230 = vst [vmem:[%s228] sm:%s220] %v229
          $region34: #{_energy_norms_and_mask.1} parent=28 // loop_footer
            %s226 = sadd.s32 1, %s222
          $region35: #{_energy_norms_and_mask.1} parent=28 // loop_footer_branch
            %221 = sbr.rel target = $region31
          $region36: #{_energy_norms_and_mask.1} parent=28 // loop_exit
            _
        $region29: #{_energy_norms_and_mask.1} parent=20 // pred_fallthru
          _
      $region21: #{_energy_norms_and_mask.1} parent=16 // pred_fallthru
        _
      %245 = vnop
    $region17: #{_energy_norms_and_mask.1} parent=1 // pred_fallthru
      _
    // Predicated region
    $region48: #{_energy_norms_and_mask.1} parent=1 // pred_check
      _
    $region49: #{_energy_norms_and_mask.1} parent=1 // pred_check_branch
      %247 = sbr.rel (0) target = $region51
    $region50: #{_energy_norms_and_mask.1} parent=1 // pred_region
      _
    $region51: #{_energy_norms_and_mask.1} parent=1 // pred_fallthru
      _

</llo_original>
